<compile_context>
chip_gen: v6e
topology: v6e:2x2x1
jax: 0.10.0
libtpu: 0.0.40
codegen_flags: <defaults>
</compile_context>

<pallas_src>
import jax
import jax.numpy as jnp
from jax.experimental import pallas as pl
from jax.experimental.pallas import tpu as pltpu


def _patch_embed_kernel(pT_ref, w1_ref, bias_ref, w2_ref, o_ref):
    # pT_ref:   (K, TN)  patch pixels; K = C*p*p on sublanes, tokens on lanes
    # w1_ref:   (E, K)   patch-projection weight (compute dtype)
    # bias_ref: (E, 2)   col 0: proj bias, col 1: folded 1x1-conv bias (f32)
    # w2_ref:   (E, E)   1x1-conv weight with LN gamma folded in
    # o_ref:    (E, TN)  output embeddings, E-major (NCHW-native)
    z = jnp.dot(w1_ref[...], pT_ref[...], preferred_element_type=jnp.float32)
    z = z + bias_ref[:, 0:1]

    # LayerNorm over the embed dim (sublane axis).  Two-pass f32 statistics
    # (biased variance, eps=1e-5) to match torch.nn.LayerNorm without the
    # E[x^2]-E[x]^2 cancellation risk.  gamma/beta are folded into w2 / bias.
    inv_e = 1.0 / z.shape[0]
    mu = jnp.sum(z, axis=0, keepdims=True) * inv_e
    d = z - mu
    var = jnp.sum(d * d, axis=0, keepdims=True) * inv_e
    xn = d * jax.lax.rsqrt(var + 1e-5)

    y = jnp.dot(w2_ref[...], xn.astype(w2_ref.dtype),
                preferred_element_type=jnp.float32)
    y = y + bias_ref[:, 1:2]
    o_ref[...] = y.astype(o_ref.dtype)


def patch_embed_forward(x, params, patch_size=4, token_tile=4096,
                        compute_dtype=jnp.bfloat16, out_dtype=jnp.float32):
    """x: (B, C, H, W) NCHW float32.  Returns (B, E, Wh, Ww) in `out_dtype`."""
    B, C, H, W = x.shape
    p = patch_size
    w_proj, b_proj, ln_g, ln_b, w_conv, b_conv = (
        params["w_proj"], params["b_proj"], params["ln_g"],
        params["ln_b"], params["w_conv"], params["b_conv"])
    E = w_proj.shape[0]
    K = C * p * p

    # Pad H, W up to a multiple of the patch size (right/bottom zeros), exactly
    # like F.pad in the reference module.  Only materialized when misaligned.
    pad_w = (-W) % p
    pad_h = (-H) % p
    if pad_w or pad_h:
        x = jnp.pad(x, ((0, 0), (0, 0), (0, pad_h), (0, pad_w)))
    Hp, Wp = H + pad_h, W + pad_w
    Wh, Ww = Hp // p, Wp // p
    Ntok = Wh * Ww

    # Single fused wrapper pass: patchify straight into the transposed
    # (K-major, token-on-lane) layout the kernel consumes, with the f32->bf16
    # cast fused into the same copy (read f32 once, write bf16 once).  K is
    # flattened in (c, ph, pw) order to match Conv2d weight flattening; tokens
    # in (wh, ww) order so the kernel output is already NCHW-ordered.
    # TODO(synk): fold this patchify into the kernel itself (BlockSpec over the
    # padded NCHW image + in-kernel lane de-interleave of the stride-p columns)
    # to drop this remaining bf16 round-trip once that relayout is verified to
    # lower cleanly in Mosaic.
    pT = x.reshape(B, C, Wh, p, Ww, p)
    pT = pT.transpose(0, 1, 3, 5, 2, 4).reshape(B, K, Ntok).astype(compute_dtype)

    # Token tile: lane-dense (multiple of 128) unless the token axis itself is
    # smaller; large by default to amortize the ~0.35us per-grid-step overhead.
    # Keep >= 2 total grid steps when possible so both v7x TensorCores get work.
    if Ntok <= 128:
        tn = Ntok
    else:
        tn = max(128, min(int(token_tile), Ntok) // 128 * 128)
        if B == 1 and tn >= Ntok:
            tn = max(128, ((Ntok + 1) // 2 + 127) // 128 * 128)
            tn = min(tn, Ntok // 128 * 128)
    n_tok_tiles = pl.cdiv(Ntok, tn)

    # Parameter prep (all tiny): transposed weights; fold the LayerNorm affine
    # into the 1x1 conv:  y = (W2 * g) @ xn + (W2 @ beta + b2).
    w1T = w_proj.reshape(E, K).astype(compute_dtype)            # (E, K)
    w2 = w_conv.reshape(E, E).astype(jnp.float32)               # (E_out, E_in)
    g = ln_g.reshape(E).astype(jnp.float32)
    beta = ln_b.reshape(E).astype(jnp.float32)
    w2T = (w2 * g[None, :]).astype(compute_dtype)               # (E_out, E_in)
    b2 = w2 @ beta + b_conv.reshape(E).astype(jnp.float32)      # (E,)
    biases = jnp.stack(
        [b_proj.reshape(E).astype(jnp.float32), b2], axis=1)    # (E, 2)

    grid = (B, n_tok_tiles)
    out = pl.pallas_call(
        _patch_embed_kernel,
        out_shape=jax.ShapeDtypeStruct((B, E, Ntok), out_dtype),
        grid_spec=pltpu.PrefetchScalarGridSpec(
            num_scalar_prefetch=0,
            grid=grid,
            in_specs=[
                pl.BlockSpec((None, K, tn), lambda b, t: (b, 0, t)),  # patches^T
                pl.BlockSpec((E, K), lambda b, t: (0, 0)),            # W1^T
                pl.BlockSpec((E, 2), lambda b, t: (0, 0)),            # biases
                pl.BlockSpec((E, E), lambda b, t: (0, 0)),            # folded W2
            ],
            out_specs=pl.BlockSpec((None, E, tn), lambda b, t: (b, 0, t)),
        ),
        compiler_params=pltpu.CompilerParams(
            dimension_semantics=("parallel", "parallel")),
    )(pT, w1T, biases, w2T)

    # (B, E, Wh*Ww) -> (B, E, Wh, Ww): contiguous split of the last dim (free).
    return out.reshape(B, E, Wh, Ww)


def patch_embed_reference(x, params, patch_size=4):
    """Pure-JAX f32 reference matching the PyTorch module."""
    B, C, H, W = x.shape
    p = patch_size
    pad_w = (-W) % p
    pad_h = (-H) % p
    if pad_w or pad_h:
        x = jnp.pad(x, ((0, 0), (0, 0), (0, pad_h), (0, pad_w)))
    Hp, Wp = H + pad_h, W + pad_w
    Wh, Ww = Hp // p, Wp // p
    E = params["w_proj"].shape[0]
    K = C * p * p
    patches = x.reshape(B, C, Wh, p, Ww, p).transpose(0, 2, 4, 1, 3, 5)
    patches = patches.reshape(B, Wh * Ww, K)
    z = patches @ params["w_proj"].reshape(E, K).T + params["b_proj"]
    mu = z.mean(-1, keepdims=True)
    var = ((z - mu) ** 2).mean(-1, keepdims=True)
    zn = (z - mu) * jax.lax.rsqrt(var + 1e-5)
    zn = zn * params["ln_g"] + params["ln_b"]
    y = zn @ params["w_conv"].reshape(E, E).T + params["b_conv"]
    return y.transpose(0, 2, 1).reshape(B, E, Wh, Ww)


def make_params(key, patch_size=4, in_chans=3, embed_dim=32):
    k1, k2, k3, k4 = jax.random.split(key, 4)
    K = in_chans * patch_size * patch_size
    scale1 = 1.0 / jnp.sqrt(K)
    scale2 = 1.0 / jnp.sqrt(embed_dim)
    return {
        "w_proj": jax.random.normal(
            k1, (embed_dim, in_chans, patch_size, patch_size),
            dtype=jnp.float32) * scale1,
        "b_proj": jax.random.normal(k2, (embed_dim,), dtype=jnp.float32) * 0.1,
        "ln_g": jnp.ones((embed_dim,), dtype=jnp.float32),
        "ln_b": jnp.zeros((embed_dim,), dtype=jnp.float32),
        "w_conv": jax.random.normal(
            k3, (embed_dim, embed_dim, 1, 1), dtype=jnp.float32) * scale2,
        "b_conv": jax.random.normal(k4, (embed_dim,), dtype=jnp.float32) * 0.1,
    }


if __name__ == "__main__":
    key = jax.random.PRNGKey(0)
    kx, kp = jax.random.split(key)

    B, C, H, W = 2, 3, 16, 16          # NCHW, like the PyTorch module
    patch_size, embed_dim = 4, 32

    x = jax.random.normal(kx, (B, C, H, W), dtype=jnp.float32)
    params = make_params(kp, patch_size=patch_size, in_chans=C,
                         embed_dim=embed_dim)

    Wh, Ww = H // patch_size, W // patch_size

    # Default (bf16 compute, f32 output) path.
    out = patch_embed_forward(x, params, patch_size=patch_size)
    out = jax.block_until_ready(out)
    assert out.shape == (B, embed_dim, Wh, Ww), out.shape
    assert jnp.all(jnp.isfinite(out)), "non-finite values in output"

    # Explicit, testable numerical parity vs a pure-JAX reference.  The bf16
    # compute path typically lands around 1e-2 relative-to-max; 0.1 is a
    # generous but still meaningful bound (a wrong layout/weight fold gives
    # O(1) errors).  The f32-compute path exercises the configurable
    # compute_dtype and is far tighter in practice.
    ref = patch_embed_reference(x, params, patch_size=patch_size)
    out_f32 = jax.block_until_ready(
        patch_embed_forward(x, params, patch_size=patch_size,
                            compute_dtype=jnp.float32))
    scale = jnp.max(jnp.abs(ref)) + 1e-6
    err_bf16 = float(jnp.max(jnp.abs(out - ref)) / scale)
    err_f32 = float(jnp.max(jnp.abs(out_f32 - ref)) / scale)
    assert err_bf16 < 0.1, err_bf16
    assert err_f32 < 0.1, err_f32

    print("KERNEL_OK")
</pallas_src>

<mosaic_0001>
module attributes {stable_mosaic.version = 11 : i64} {
  func.func @_patch_embed_kernel(%arg0: i32, %arg1: i32, %arg2: memref<1x48x16xbf16, #tpu.memory_space<vmem>>, %arg3: memref<32x48xbf16, #tpu.memory_space<vmem>>, %arg4: memref<32x2xf32, #tpu.memory_space<vmem>>, %arg5: memref<32x32xbf16, #tpu.memory_space<vmem>>, %arg6: memref<1x32x16xf32, #tpu.memory_space<vmem>>) attributes {dimension_semantics = [#tpu.dimension_semantics<parallel>, #tpu.dimension_semantics<parallel>], iteration_bounds = array<i64: 2, 1>, scalar_prefetch = 0 : i64, scratch_operands = 0 : i64, tpu.core_type = #tpu.core_type<tc>, window_params = [{transform_indices = @transform_0, window_bounds = array<i64: 1, 48, 16>}, {pipeline_mode = #tpu.pipeline_mode<synchronous>, transform_indices = @transform_1, window_bounds = array<i64: 32, 48>}, {pipeline_mode = #tpu.pipeline_mode<synchronous>, transform_indices = @transform_2, window_bounds = array<i64: 32, 2>}, {pipeline_mode = #tpu.pipeline_mode<synchronous>, transform_indices = @transform_3, window_bounds = array<i64: 32, 32>}, {transform_indices = @transform_4, window_bounds = array<i64: 1, 32, 16>}]} {
    %c0 = arith.constant 0 : index
    %c0_0 = arith.constant 0 : index
    %0 = vector.load %arg3[%c0, %c0_0] : memref<32x48xbf16, #tpu.memory_space<vmem>>, vector<32x48xbf16>
    %c0_1 = arith.constant 0 : index
    %c0_2 = arith.constant 0 : index
    %c0_3 = arith.constant 0 : index
    %1 = vector.load %arg2[%c0_1, %c0_2, %c0_3] : memref<1x48x16xbf16, #tpu.memory_space<vmem>>, vector<1x48x16xbf16>
    %2 = vector.shape_cast %1 : vector<1x48x16xbf16> to vector<48x16xbf16>
    %cst = arith.constant dense<0.000000e+00> : vector<32x16xf32>
    %3 = tpu.matmul %0, %2, %cst {dimension_numbers = #tpu.dot_dimension_numbers<[1], [0], [0], [1], [0, 0, 1, 1], [], []>} : vector<32x48xbf16>, vector<48x16xbf16>, vector<32x16xf32> -> vector<32x16xf32>
    %c0_4 = arith.constant 0 : index
    %c0_5 = arith.constant 0 : index
    %4 = vector.load %arg4[%c0_4, %c0_5] : memref<32x2xf32, #tpu.memory_space<vmem>>, vector<32x1xf32>
    %5 = vector.broadcast %4 : vector<32x1xf32> to vector<32x16xf32>
    %6 = arith.addf %3, %5 : vector<32x16xf32>
    %cst_6 = arith.constant dense<0.000000e+00> : vector<16xf32>
    %7 = vector.multi_reduction <add>, %6, %cst_6 [0] : vector<32x16xf32> to vector<16xf32>
    %8 = vector.shape_cast %7 : vector<16xf32> to vector<1x16xf32>
    %cst_7 = arith.constant 3.125000e-02 : f32
    %9 = vector.broadcast %cst_7 : f32 to vector<1x16xf32>
    %10 = arith.mulf %8, %9 : vector<1x16xf32>
    %11 = vector.broadcast %10 : vector<1x16xf32> to vector<32x16xf32>
    %12 = arith.subf %6, %11 : vector<32x16xf32>
    %13 = arith.mulf %12, %12 : vector<32x16xf32>
    %cst_8 = arith.constant dense<0.000000e+00> : vector<16xf32>
    %14 = vector.multi_reduction <add>, %13, %cst_8 [0] : vector<32x16xf32> to vector<16xf32>
    %15 = vector.shape_cast %14 : vector<16xf32> to vector<1x16xf32>
    %cst_9 = arith.constant 3.125000e-02 : f32
    %16 = vector.broadcast %cst_9 : f32 to vector<1x16xf32>
    %17 = arith.mulf %15, %16 : vector<1x16xf32>
    %cst_10 = arith.constant 9.99999974E-6 : f32
    %18 = vector.broadcast %cst_10 : f32 to vector<1x16xf32>
    %19 = arith.addf %17, %18 : vector<1x16xf32>
    %20 = math.rsqrt %19 : vector<1x16xf32>
    %21 = vector.broadcast %20 : vector<1x16xf32> to vector<32x16xf32>
    %22 = arith.mulf %12, %21 : vector<32x16xf32>
    %c0_11 = arith.constant 0 : index
    %c0_12 = arith.constant 0 : index
    %23 = vector.load %arg5[%c0_11, %c0_12] : memref<32x32xbf16, #tpu.memory_space<vmem>>, vector<32x32xbf16>
    %24 = arith.truncf %22 : vector<32x16xf32> to vector<32x16xbf16>
    %cst_13 = arith.constant dense<0.000000e+00> : vector<32x16xf32>
    %25 = tpu.matmul %23, %24, %cst_13 {dimension_numbers = #tpu.dot_dimension_numbers<[1], [0], [0], [1], [0, 0, 1, 1], [], []>} : vector<32x32xbf16>, vector<32x16xbf16>, vector<32x16xf32> -> vector<32x16xf32>
    %c0_14 = arith.constant 0 : index
    %c1 = arith.constant 1 : index
    %26 = vector.load %arg4[%c0_14, %c1] : memref<32x2xf32, #tpu.memory_space<vmem>>, vector<32x1xf32>
    %27 = vector.broadcast %26 : vector<32x1xf32> to vector<32x16xf32>
    %28 = arith.addf %25, %27 : vector<32x16xf32>
    %c0_15 = arith.constant 0 : index
    %c0_16 = arith.constant 0 : index
    %c0_17 = arith.constant 0 : index
    %29 = vector.load %arg6[%c0_15, %c0_16, %c0_17] : memref<1x32x16xf32, #tpu.memory_space<vmem>>, vector<1x32x16xf32>
    %30 = vector.shape_cast %29 : vector<1x32x16xf32> to vector<32x16xf32>
    %31 = vector.shape_cast %28 : vector<32x16xf32> to vector<1x32x16xf32>
    tpu.vector_store %arg6[%c0_15, %c0_16, %c0_17], %31 {strides = array<i32>} : memref<1x32x16xf32, #tpu.memory_space<vmem>>, vector<1x32x16xf32>,
    return
  }
  func.func @transform_0(%arg0: i32, %arg1: i32) -> (i32, i32, i32) {
    %c0_i32 = arith.constant 0 : i32
    %c0_i32_0 = arith.constant 0 : i32
    return %arg0, %c0_i32, %arg1 : i32, i32, i32
  }
  func.func @transform_1(%arg0: i32, %arg1: i32) -> (i32, i32) {
    %c0_i32 = arith.constant 0 : i32
    %c0_i32_0 = arith.constant 0 : i32
    %c0_i32_1 = arith.constant 0 : i32
    return %c0_i32, %c0_i32_0 : i32, i32
  }
  func.func @transform_2(%arg0: i32, %arg1: i32) -> (i32, i32) {
    %c0_i32 = arith.constant 0 : i32
    %c0_i32_0 = arith.constant 0 : i32
    %c0_i32_1 = arith.constant 0 : i32
    return %c0_i32, %c0_i32_0 : i32, i32
  }
  func.func @transform_3(%arg0: i32, %arg1: i32) -> (i32, i32) {
    %c0_i32 = arith.constant 0 : i32
    %c0_i32_0 = arith.constant 0 : i32
    %c0_i32_1 = arith.constant 0 : i32
    return %c0_i32, %c0_i32_0 : i32, i32
  }
  func.func @transform_4(%arg0: i32, %arg1: i32) -> (i32, i32, i32) {
    %c0_i32 = arith.constant 0 : i32
    %c0_i32_0 = arith.constant 0 : i32
    return %arg0, %c0_i32, %arg1 : i32, i32, i32
  }
}

</mosaic_0001>

<llo_original>
// kernel: tpu_custom_call.1
$region0: #{tpu_custom_call.1}
  #allocation0 [shape = 'u32[]', space=smem, size = 0x4, offset = 0x4, fixed_abs, tag = 'smem constant byte address 0x4 - core index']
  #allocation1 [shape = 'u32[144,128]{1,0:T(1,128)}', space=vmem, size = 0x12000, scoped, tag = 'internal scratch']
  %s0 = inlined_call_operand.vmem [shape: bf16[2,48,16], index: 0, kind: input, shape index: {}]
  %s1 = inlined_call_operand.vmem [shape: bf16[32,48], index: 1, kind: input, shape index: {}]
  %s2 = inlined_call_operand.vmem [shape: f32[32,2], index: 2, kind: input, shape index: {}]
  %s3 = inlined_call_operand.vmem [shape: bf16[32,32], index: 3, kind: input, shape index: {}]
  %s4 = inlined_call_operand.vmem [shape: f32[2,32,16], index: 4, kind: output, shape index: {}]
  %s5 = sld [smem:[#allocation0]]
  $region49: #{tpu_custom_call.1} parent=0
    _
  %s7 = ssub.s32 1, %s5
  %s8 = scalar_select 0, %s7, %s5
  loop: start=0, step=1, limit=4
  $region2: #{tpu_custom_call.1} parent=0 // loop_pre_header
    _
  $region3: #{tpu_custom_call.1} parent=0 // loop_header
    %s10 = sphi 0, %s14
    %p11 = scmp.ge.s32.totalorder %s10, 4
    %s17 = sphi 0, %s29
    %s18 = sphi 0, %s25
    %s19 = sphi 0, %s17
    %s20 = sphi 0, %s18
    %s21 = sphi 0, %s19
    %s22 = sphi 0, %s20
    %s34 = sphi 0, %s36
    %s37 = sphi 0, %s34
    %s38 = sphi 0, %s37
    %s54 = sphi 0, %s38
    %s58 = sphi 0, %s58
    %s60 = sphi 0, %s58
    %s61 = sphi 0, %s60
    %s75 = sphi 0, %s61
    %s79 = sphi 0, %s79
    %s81 = sphi 0, %s79
    %s82 = sphi 0, %s81
    %s96 = sphi 0, %s82
    %s100 = sphi 0, %s100
    %s102 = sphi 0, %s100
    %s103 = sphi 0, %s102
    %s117 = sphi 0, %s103
    %s125 = sphi 0, %s127
    %s128 = sphi 0, %s125
    %s129 = sphi 0, %s128
    %s145 = sphi 0, %s129
  $region4: #{tpu_custom_call.1} parent=0 // loop_header_branch
    %13 = sbr.rel (%p11) target = $region8
  $region5: #{tpu_custom_call.1} parent=0 // loop_body
    %s15 = ssub.s32 %s10, 1
    %s16 = ssub.s32 %s10, 2
    %s23 = sadd.s32 1, %s18
    %p24 = scmp.ge.s32.totalorder %s23, 1
    %s25 = scalar_select %p24, 0, %s23
    %s26 = sadd.s32 1, %s17
    %s27 = scalar_select %p24, %s26, %s17
    %p28 = scmp.ge.s32.totalorder %s27, 2
    %s29 = scalar_select %p28, 0, %s27
    %s30 = ssub.s32 %s17, %s29
    %s31 = ssub.s32 %s18, %s25
    %s32 = sor.u32 %s30, %s31
    %p33 = scmp.eq.s32.totalorder %s32, 0
    %s35 = sadd.s32 %s34, 1
    %s36 = scalar_select %p33, %s34, %s35
    %p39 = pneg %p33
    %p40 = scmp.eq.s32.totalorder %s10, 1
    %p41 = por %p39, %p40
    %p42 = scmp.ne.s32.totalorder %s34, %s37
    %p43 = scmp.eq.s32.totalorder %s10, 0
    %p44 = por %p42, %p43
    %p45 = scmp.ne.s32.totalorder %s34, %s37
    %p46 = scmp.eq.s32.totalorder %s15, 1
    %p47 = por %p45, %p46
    %p48 = scmp.ne.s32.totalorder %s37, %s38
    %p49 = scmp.eq.s32.totalorder %s15, 0
    %p50 = por %p48, %p49
    %p51 = scmp.ne.s32.totalorder %s37, %s38
    %p52 = scmp.eq.s32.totalorder %s16, 1
    %p53 = por %p51, %p52
    %p55 = scmp.ne.s32.totalorder %s38, %s54
    %p56 = scmp.eq.s32.totalorder %s16, 0
    %p57 = por %p55, %p56
    %s59 = sadd.s32 %s58, 1
    %p62 = scmp.eq.s32.totalorder %s10, 1
    %p63 = scmp.ne.s32.totalorder %s58, %s60
    %p64 = scmp.eq.s32.totalorder %s10, 0
    %p65 = por %p63, %p64
    %p66 = scmp.ne.s32.totalorder %s58, %s60
    %p67 = scmp.eq.s32.totalorder %s15, 1
    %p68 = por %p66, %p67
    %p69 = scmp.ne.s32.totalorder %s60, %s61
    %p70 = scmp.eq.s32.totalorder %s15, 0
    %p71 = por %p69, %p70
    %p72 = scmp.ne.s32.totalorder %s60, %s61
    %p73 = scmp.eq.s32.totalorder %s16, 1
    %p74 = por %p72, %p73
    %p76 = scmp.ne.s32.totalorder %s61, %s75
    %p77 = scmp.eq.s32.totalorder %s16, 0
    %p78 = por %p76, %p77
    %s80 = sadd.s32 %s79, 1
    %p83 = scmp.eq.s32.totalorder %s10, 1
    %p84 = scmp.ne.s32.totalorder %s79, %s81
    %p85 = scmp.eq.s32.totalorder %s10, 0
    %p86 = por %p84, %p85
    %p87 = scmp.ne.s32.totalorder %s79, %s81
    %p88 = scmp.eq.s32.totalorder %s15, 1
    %p89 = por %p87, %p88
    %p90 = scmp.ne.s32.totalorder %s81, %s82
    %p91 = scmp.eq.s32.totalorder %s15, 0
    %p92 = por %p90, %p91
    %p93 = scmp.ne.s32.totalorder %s81, %s82
    %p94 = scmp.eq.s32.totalorder %s16, 1
    %p95 = por %p93, %p94
    %p97 = scmp.ne.s32.totalorder %s82, %s96
    %p98 = scmp.eq.s32.totalorder %s16, 0
    %p99 = por %p97, %p98
    %s101 = sadd.s32 %s100, 1
    %p104 = scmp.eq.s32.totalorder %s10, 1
    %p105 = scmp.ne.s32.totalorder %s100, %s102
    %p106 = scmp.eq.s32.totalorder %s10, 0
    %p107 = por %p105, %p106
    %p108 = scmp.ne.s32.totalorder %s100, %s102
    %p109 = scmp.eq.s32.totalorder %s15, 1
    %p110 = por %p108, %p109
    %p111 = scmp.ne.s32.totalorder %s102, %s103
    %p112 = scmp.eq.s32.totalorder %s15, 0
    %p113 = por %p111, %p112
    %p114 = scmp.ne.s32.totalorder %s102, %s103
    %p115 = scmp.eq.s32.totalorder %s16, 1
    %p116 = por %p114, %p115
    %p118 = scmp.ne.s32.totalorder %s103, %s117
    %p119 = scmp.eq.s32.totalorder %s16, 0
    %p120 = por %p118, %p119
    %s121 = ssub.s32 %s17, %s29
    %s122 = ssub.s32 %s18, %s25
    %s123 = sor.u32 %s121, %s122
    %p124 = scmp.eq.s32.totalorder %s123, 0
    %s126 = sadd.s32 %s125, 1
    %s127 = scalar_select %p124, %s125, %s126
    %p130 = pneg %p124
    %p131 = scmp.eq.s32.totalorder %s10, 1
    %p132 = por %p130, %p131
    %p133 = scmp.ne.s32.totalorder %s125, %s128
    %p134 = scmp.eq.s32.totalorder %s10, 0
    %p135 = por %p133, %p134
    %p136 = scmp.ne.s32.totalorder %s125, %s128
    %p137 = scmp.eq.s32.totalorder %s15, 1
    %p138 = por %p136, %p137
    %p139 = scmp.ne.s32.totalorder %s128, %s129
    %p140 = scmp.eq.s32.totalorder %s15, 0
    %p141 = por %p139, %p140
    %p142 = scmp.ne.s32.totalorder %s128, %s129
    %p143 = scmp.eq.s32.totalorder %s16, 1
    %p144 = por %p142, %p143
    %p146 = scmp.ne.s32.totalorder %s129, %s145
    %p147 = scmp.eq.s32.totalorder %s16, 0
    %p148 = por %p146, %p147
    %p149 = scmp.le.s32.totalorder 1, %s10
    %p150 = scmp.lt.s32.totalorder %s10, 3
    %p151 = pnand %p149, %p150
    %p152 = pneg %p151
    // Predicated region
    $region9: #{tpu_custom_call.1} parent=5 // pred_check
      _
    $region10: #{tpu_custom_call.1} parent=5 // pred_check_branch
      %154 = sbr.rel (%p151) target = $region12
    $region11: #{tpu_custom_call.1} parent=5 // pred_region
      %s155 = ssub.s32 %s10, 1
      // Predicated region
      $region13: #{tpu_custom_call.1} parent=11 // pred_check
        %p156 = pneg %p71
      $region14: #{tpu_custom_call.1} parent=11 // pred_check_branch
        %158 = sbr.rel (%p156) target = $region16
      $region15: #{tpu_custom_call.1} parent=11 // pred_region
        _
      $region16: #{tpu_custom_call.1} parent=11 // pred_fallthru
        _
      // Predicated region
      $region17: #{tpu_custom_call.1} parent=11 // pred_check
        %p159 = pneg %p92
      $region18: #{tpu_custom_call.1} parent=11 // pred_check_branch
        %161 = sbr.rel (%p159) target = $region20
      $region19: #{tpu_custom_call.1} parent=11 // pred_region
        _
      $region20: #{tpu_custom_call.1} parent=11 // pred_fallthru
        _
      // Predicated region
      $region21: #{tpu_custom_call.1} parent=11 // pred_check
        %p162 = pneg %p113
      $region22: #{tpu_custom_call.1} parent=11 // pred_check_branch
        %164 = sbr.rel (%p162) target = $region24
      $region23: #{tpu_custom_call.1} parent=11 // pred_region
        _
      $region24: #{tpu_custom_call.1} parent=11 // pred_fallthru
        _
    $region12: #{tpu_custom_call.1} parent=5 // pred_fallthru
      _
    %p165 = scmp.lt.s32.totalorder %s10, 2
    // Predicated region
    $region25: #{tpu_custom_call.1} parent=5 // pred_check
      %p166 = pneg %p165
    $region26: #{tpu_custom_call.1} parent=5 // pred_check_branch
      %168 = sbr.rel (%p166) target = $region28
    $region27: #{tpu_custom_call.1} parent=5 // pred_region
      // Predicated region
      $region29: #{tpu_custom_call.1} parent=27 // pred_check
        %p169 = pneg %p44
      $region30: #{tpu_custom_call.1} parent=27 // pred_check_branch
        %171 = sbr.rel (%p169) target = $region32
      $region31: #{tpu_custom_call.1} parent=27 // pred_region
        %p172 = scmp.lt.s32.totalorder %s17, 1
        %s173 = scalar_select %p172, %s17, 1
        %p174 = scmp.lt.s32.totalorder %s18, 0
        %s175 = scalar_select %p174, %s18, 0
        %s176 = smul.addr %s173, 6
        %s177 = sadd.s32 %s175, %s176
        %s178 = smul.addr %s177, 4
        %s179 = scalar_lea.vmem %s0, %s178
      $region32: #{tpu_custom_call.1} parent=27 // pred_fallthru
        _
    $region28: #{tpu_custom_call.1} parent=5 // pred_fallthru
      _
    %p180 = scmp.le.s32.totalorder 1, %s10
    %p181 = scmp.lt.s32.totalorder %s10, 3
    %p182 = pnand %p180, %p181
    %p183 = pneg %p182
    // Predicated region
    $region33: #{tpu_custom_call.1} parent=5 // pred_check
      _
    $region34: #{tpu_custom_call.1} parent=5 // pred_check_branch
      %185 = sbr.rel (%p182) target = $region36
    $region35: #{tpu_custom_call.1} parent=5 // pred_region
      %s186 = ssub.s32 %s10, 1
      %p187 = scmp.lt.s32.totalorder %s19, 1
      %s188 = scalar_select %p187, %s19, 1
      %p189 = scmp.lt.s32.totalorder %s20, 0
      %s190 = scalar_select %p189, %s20, 0
      %s191 = smul.addr %s188, 6
      %s192 = sadd.s32 %s190, %s191
      %s193 = smul.addr %s192, 4
      %s194 = scalar_lea.vmem %s0, %s193
      %p195 = pneg %p50
      %p196 = pneg %p47
      %p197 = pneg %p71
      %p198 = pneg %p68
      %p199 = pneg %p92
      %p200 = pneg %p89
      %p201 = pneg %p113
      %p202 = pneg %p110
      %p203 = pneg %p141
      %p204 = pneg %p138
      %p205 = scmp.lt.s32.totalorder %s19, 1
      %s206 = scalar_select %p205, %s19, 1
      %p207 = scmp.lt.s32.totalorder %s20, 0
      %s208 = scalar_select %p207, %s20, 0
      %s209 = smul.addr %s206, 4
      %s210 = sadd.s32 %s208, %s209
      %s211 = smul.addr %s210, 8
      %s212 = scalar_lea.vmem %s4, %s211
      %p213 = scmp.lt.s32.totalorder %s19, 1
      %s214 = scalar_select %p213, %s19, 1
      %p215 = scmp.lt.s32.totalorder %s20, 0
      %s216 = scalar_select %p215, %s20, 0
      %s217 = smul.addr %s214, 6
      %s218 = sadd.s32 %s216, %s217
      %s219 = smul.addr %s218, 4
      %s220 = scalar_lea.vmem %s0, %s219
      %p221 = scmp.lt.s32.totalorder %s19, 1
      %s222 = scalar_select %p221, %s19, 1
      %p223 = scmp.lt.s32.totalorder %s20, 0
      %s224 = scalar_select %p223, %s20, 0
      %s225 = smul.addr %s222, 4
      %s226 = sadd.s32 %s224, %s225
      %s227 = smul.addr %s226, 8
      %s228 = scalar_lea.vmem %s4, %s227
      %v230 = vld [vmem:[%s1] sm:$0xf]
      %v231 = vld [vmem:[%s1 + $0x4] sm:$0xf]
      %v232 = vld [vmem:[%s1 + $0x8] sm:$0xf]
      %v233 = vld [vmem:[%s1 + $0xc] sm:$0xf]
      %v234 = vld [vmem:[%s220] sm:$0xf]
      %v235 = vld [vmem:[%s220 + $0x4] sm:$0xf]
      %v236 = vld [vmem:[%s220 + $0x8] sm:$0xf]
      %v237 = vld [vmem:[%s220 + $0xc] sm:$0xf]
      %v238 = vld [vmem:[%s220 + $0x10] sm:$0xf]
      %v239 = vld [vmem:[%s220 + $0x14] sm:$0xf]
      %v240 = vld [vmem:[%s2] sm:$0xff]
      %v241 = vld [vmem:[%s2 + $0x8] sm:$0xff]
      %v242 = vld [vmem:[%s2 + $0x10] sm:$0xff]
      %v243 = vld [vmem:[%s2 + $0x18] sm:$0xff]
      %245 = vset.pattern.permute.xlu0 0
      %246 = vperm.xlu0 %245, %v240
      %v247 = vpop.permute.xlu0 %246
      %250 = vset.pattern.permute.xlu0 0
      %251 = vperm.xlu0 %250, %v241
      %v252 = vpop.permute.xlu0 %251
      %255 = vset.pattern.permute.xlu0 0
      %256 = vperm.xlu0 %255, %v242
      %v257 = vpop.permute.xlu0 %256
      %260 = vset.pattern.permute.xlu0 0
      %261 = vperm.xlu0 %260, %v243
      %v262 = vpop.permute.xlu0 %261
      %v268 = vunpack.c.l.b16 %v230
      %v269 = vunpack.c.l.b16 %v231
      %v270 = vunpack.c.l.b16 %v232
      %v271 = vunpack.c.l.b16 %v233
      %v272 = vpack.c.b16 %v269, %v268
      %v273 = vpack.c.b16 %v271, %v270
      %v280 = vunpack.c.l.b16 %v234
      %v281 = vunpack.c.l.b16 %v235
      %v282 = vunpack.c.l.b16 %v236
      %v283 = vunpack.c.l.b16 %v237
      %v284 = vunpack.c.l.b16 %v238
      %v285 = vunpack.c.l.b16 %v239
      %v286 = vpack.c.b16 %v281, %v280
      %v287 = vpack.c.b16 %v283, %v282
      %v288 = vpack.c.b16 %v285, %v284
      %vm292 = vcmask 392192
      %v294 = vsel %vm292, %v272, 0
      %v297 = vsel %vm292, %v273, 0
      %299 = vmatprep.subr.bf16.mxu0 0
      %300 = vmatpush1.bf16.msra.mxu0 0
      %301 = vmatprep.subr.bf16.mxu0 0
      %302 = vmatpush1.bf16.msra.mxu0 0
      %303 = vmatprep.subr.bf16.mxu0 0
      %304 = vmatpush1.bf16.msra.mxu0 0
      %305 = vmatprep.subr.bf16.mxu0 0
      %306 = vmatpush1.bf16.msra.mxu0 0
      %307 = vmatprep.subr.bf16.mxu0 0
      %308 = vmatpush1.bf16.msra.mxu0 0
      %309 = vmatprep.subr.bf16.mxu0 0
      %310 = vmatpush1.bf16.msra.mxu0 %v288
      %311 = vmatprep.subr.bf16.mxu0 0
      %312 = vmatpush1.bf16.msra.mxu0 %v287
      %313 = vmatprep.subr.bf16.mxu0 0
      %314 = vmatpush1.bf16.msra.mxu0 %v286
      %315 = vmatprep.subr.bf16.mxu0 0
      %316 = vmatpush2.bf16.msra.mxu0 0
      %317 = vmatprep.subr.bf16.mxu0 0
      %318 = vmatpush2.bf16.msra.mxu0 0
      %319 = vmatprep.subr.bf16.mxu0 0
      %320 = vmatpush2.bf16.msra.mxu0 0
      %321 = vmatprep.subr.bf16.mxu0 0
      %322 = vmatpush2.bf16.msra.mxu0 0
      %323 = vmatprep.subr.bf16.mxu0 0
      %324 = vmatpush2.bf16.msra.mxu0 0
      %325 = vmatprep.subr.bf16.mxu0 0
      %326 = vmatpush2.bf16.msra.mxu0 0
      %327 = vmatprep.subr.bf16.mxu0 0
      %328 = vmatpush2.bf16.msra.mxu0 0
      %329 = vmatprep.subr.bf16.mxu0 0
      %330 = vmatpush2.bf16.msra.mxu0 0
      %331 = vmatprep.mubr.bf16.mxu0 0
      %332 = vmatmul.mubr.bf16.gmra.mxu0 %v294
      %v333 = vpop.f32.mrf.mxu0
      %v334 = vadd.f32 %v247, %v333
      %v335 = vpop.f32.mrf.mxu0
      %v336 = vpop.f32.mrf.mxu0
      %v337 = vadd.f32 %v252, %v336
      %v338 = vpop.f32.mrf.mxu0
      %339 = vmatprep.mubr.bf16.mxu0 0
      %340 = vmatmul.mubr.bf16.gmra.mxu0 %v297
      %v341 = vpop.f32.mrf.mxu0
      %v342 = vadd.f32 %v257, %v341
      %v343 = vpop.f32.mrf.mxu0
      %v344 = vpop.f32.mrf.mxu0
      %v345 = vadd.f32 %v262, %v344
      %v346 = vpop.f32.mrf.mxu0
      %347 = vdwg.mxu0
      %vm348 = vcmask 130048
      %v349 = vsel %vm348, %v334, 0.0
      %v350 = vsel %vm348, %v337, 0.0
      %v351 = vadd.f32 %v349, %v350
      %v352 = vsel %vm348, %v342, 0.0
      %v353 = vadd.f32 %v351, %v352
      %v354 = vsel %vm348, %v345, 0.0
      %v355 = vadd.f32 %v353, %v354
      %v356 = vrot.slane %v355, 4
      %v357 = vadd.f32 %v355, %v356
      %v358 = vrot.slane %v357, 2
      %v359 = vadd.f32 %v357, %v358
      %v360 = vrot.slane %v359, 1
      %v361 = vadd.f32 %v359, %v360
      %v362 = vmul.f32 %v361, 0.03125
      %v363 = vsub.f32 %v334, %v362
      %v364 = vsub.f32 %v337, %v362
      %v365 = vsub.f32 %v342, %v362
      %v366 = vsub.f32 %v345, %v362
      %v367 = vmul.f32 %v363, %v363
      %v368 = vmul.f32 %v364, %v364
      %v369 = vmul.f32 %v365, %v365
      %v370 = vmul.f32 %v366, %v366
      %v371 = vsel %vm348, %v367, 0.0
      %v372 = vsel %vm348, %v368, 0.0
      %v373 = vadd.f32 %v371, %v372
      %v374 = vsel %vm348, %v369, 0.0
      %v375 = vadd.f32 %v373, %v374
      %v376 = vsel %vm348, %v370, 0.0
      %v377 = vadd.f32 %v375, %v376
      %v378 = vrot.slane %v377, 4
      %v379 = vadd.f32 %v377, %v378
      %v380 = vrot.slane %v379, 2
      %v381 = vadd.f32 %v379, %v380
      %v382 = vrot.slane %v381, 1
      %v383 = vadd.f32 %v381, %v382
      %v384 = vmul.f32 %v383, 0.03125
      %v385 = vadd.f32 %v384, 1e-05
      %v386 = vrsqrt.pop %v385
      %v387 = vmul.f32 %v363, %v386
      %v388 = vmul.f32 %v364, %v386
      %v389 = vmul.f32 %v365, %v386
      %v390 = vmul.f32 %v366, %v386
      %v391 = vld [vmem:[%s3] sm:$0xf]
      %v392 = vld [vmem:[%s3 + $0x4] sm:$0xf]
      %v393 = vld [vmem:[%s3 + $0x8] sm:$0xf]
      %v394 = vld [vmem:[%s3 + $0xc] sm:$0xf]
      %v395 = vpack.c.bf16 %v388, %v387
      %v396 = vpack.c.bf16 %v390, %v389
      %397 = vset.pattern.permute.xlu0 1
      %398 = vperm.xlu0 %397, %v240
      %v399 = vpop.permute.xlu0 %398
      %401 = vset.pattern.permute.xlu0 1
      %402 = vperm.xlu0 %401, %v241
      %v403 = vpop.permute.xlu0 %402
      %405 = vset.pattern.permute.xlu0 1
      %406 = vperm.xlu0 %405, %v242
      %v407 = vpop.permute.xlu0 %406
      %409 = vset.pattern.permute.xlu0 1
      %410 = vperm.xlu0 %409, %v243
      %v411 = vpop.permute.xlu0 %410
      %v417 = vunpack.c.l.b16 %v391
      %v418 = vunpack.c.l.b16 %v392
      %v419 = vunpack.c.l.b16 %v393
      %v420 = vunpack.c.l.b16 %v394
      %v421 = vpack.c.b16 %v418, %v417
      %v422 = vpack.c.b16 %v420, %v419
      %vm423 = vcmask 261120
      %v425 = vsel %vm423, %v421, 0
      %v428 = vsel %vm423, %v422, 0
      %430 = vmatprep.subr.bf16.mxu0 0
      %431 = vmatpush1.bf16.msra.mxu0 0
      %432 = vmatprep.subr.bf16.mxu0 0
      %433 = vmatpush1.bf16.msra.mxu0 0
      %434 = vmatprep.subr.bf16.mxu0 0
      %435 = vmatpush1.bf16.msra.mxu0 0
      %436 = vmatprep.subr.bf16.mxu0 0
      %437 = vmatpush1.bf16.msra.mxu0 0
      %438 = vmatprep.subr.bf16.mxu0 0
      %439 = vmatpush1.bf16.msra.mxu0 0
      %440 = vmatprep.subr.bf16.mxu0 0
      %441 = vmatpush1.bf16.msra.mxu0 0
      %442 = vmatprep.subr.bf16.mxu0 0
      %443 = vmatpush1.bf16.msra.mxu0 %v396
      %444 = vmatprep.subr.bf16.mxu0 0
      %445 = vmatpush1.bf16.msra.mxu0 %v395
      %446 = vmatprep.subr.bf16.mxu0 0
      %447 = vmatpush2.bf16.msra.mxu0 0
      %448 = vmatprep.subr.bf16.mxu0 0
      %449 = vmatpush2.bf16.msra.mxu0 0
      %450 = vmatprep.subr.bf16.mxu0 0
      %451 = vmatpush2.bf16.msra.mxu0 0
      %452 = vmatprep.subr.bf16.mxu0 0
      %453 = vmatpush2.bf16.msra.mxu0 0
      %454 = vmatprep.subr.bf16.mxu0 0
      %455 = vmatpush2.bf16.msra.mxu0 0
      %456 = vmatprep.subr.bf16.mxu0 0
      %457 = vmatpush2.bf16.msra.mxu0 0
      %458 = vmatprep.subr.bf16.mxu0 0
      %459 = vmatpush2.bf16.msra.mxu0 0
      %460 = vmatprep.subr.bf16.mxu0 0
      %461 = vmatpush2.bf16.msra.mxu0 0
      %462 = vmatprep.mubr.bf16.mxu0 0
      %463 = vmatmul.mubr.bf16.gmra.mxu0 %v425
      %v464 = vpop.f32.mrf.mxu0
      %v465 = vadd.f32 %v399, %v464
      %v466 = vpop.f32.mrf.mxu0
      %v467 = vpop.f32.mrf.mxu0
      %v468 = vadd.f32 %v403, %v467
      %v469 = vpop.f32.mrf.mxu0
      %470 = vmatprep.mubr.bf16.mxu0 0
      %471 = vmatmul.mubr.bf16.gmra.mxu0 %v428
      %v472 = vpop.f32.mrf.mxu0
      %v473 = vadd.f32 %v407, %v472
      %v474 = vpop.f32.mrf.mxu0
      %v475 = vpop.f32.mrf.mxu0
      %v476 = vadd.f32 %v411, %v475
      %v477 = vpop.f32.mrf.mxu0
      %478 = vdwg.mxu0
      %479 = vst.msk [vmem:[%s228] sm:$0xff] %vm348, %v465
      %480 = vst.msk [vmem:[%s228 + $0x8] sm:$0xff] %vm348, %v468
      %481 = vst.msk [vmem:[%s228 + $0x10] sm:$0xff] %vm348, %v473
      %482 = vst.msk [vmem:[%s228 + $0x18] sm:$0xff] %vm348, %v476
      %p483 = scmp.lt.s32.totalorder %s19, 1
      %s484 = scalar_select %p483, %s19, 1
      %p485 = scmp.lt.s32.totalorder %s20, 0
      %s486 = scalar_select %p485, %s20, 0
      %s487 = smul.addr %s484, 4
      %s488 = sadd.s32 %s486, %s487
      %s489 = smul.addr %s488, 8
      %s490 = scalar_lea.vmem %s4, %s489
      // Predicated region
      $region37: #{tpu_custom_call.1} parent=35 // pred_check
        %p491 = pneg %p138
      $region38: #{tpu_custom_call.1} parent=35 // pred_check_branch
        %493 = sbr.rel (%p491) target = $region40
      $region39: #{tpu_custom_call.1} parent=35 // pred_region
        _
      $region40: #{tpu_custom_call.1} parent=35 // pred_fallthru
        _
    $region36: #{tpu_custom_call.1} parent=5 // pred_fallthru
      _
    %p494 = scmp.le.s32.totalorder 2, %s10
    // Predicated region
    $region41: #{tpu_custom_call.1} parent=5 // pred_check
      %p495 = pneg %p494
    $region42: #{tpu_custom_call.1} parent=5 // pred_check_branch
      %497 = sbr.rel (%p495) target = $region44
    $region43: #{tpu_custom_call.1} parent=5 // pred_region
      %s498 = ssub.s32 %s10, 2
      // Predicated region
      $region45: #{tpu_custom_call.1} parent=43 // pred_check
        %p499 = pneg %p144
      $region46: #{tpu_custom_call.1} parent=43 // pred_check_branch
        %501 = sbr.rel (%p499) target = $region48
      $region47: #{tpu_custom_call.1} parent=43 // pred_region
        %p502 = scmp.lt.s32.totalorder %s21, 1
        %s503 = scalar_select %p502, %s21, 1
        %p504 = scmp.lt.s32.totalorder %s22, 0
        %s505 = scalar_select %p504, %s22, 0
        %s506 = smul.addr %s503, 4
        %s507 = sadd.s32 %s505, %s506
        %s508 = smul.addr %s507, 8
        %s509 = scalar_lea.vmem %s4, %s508
      $region48: #{tpu_custom_call.1} parent=43 // pred_fallthru
        _
    $region44: #{tpu_custom_call.1} parent=5 // pred_fallthru
      _
  $region6: #{tpu_custom_call.1} parent=0 // loop_footer
    %s14 = sadd.s32 1, %s10
  $region7: #{tpu_custom_call.1} parent=0 // loop_footer_branch
    %9 = sbr.rel target = $region3
  $region8: #{tpu_custom_call.1} parent=0 // loop_exit
    _

</llo_original>
